<compile_context>
chip_gen: v6e
topology: v6e:2x2x1
jax: 0.10.0
libtpu: 0.0.40
codegen_flags: <defaults>
</compile_context>

<pallas_src>
import functools

import jax
import jax.numpy as jnp
from jax.experimental import pallas as pl
from jax.experimental.pallas import tpu as pltpu

LANE = 128


def _round_up(n, m):
    return ((n + m - 1) // m) * m


def _mlp_kernel(x_ref, w1_ref, b1_ref, w2_ref, b2_ref,
                w3_ref, b3_ref, w4_ref, b4_ref, o_ref):
    cd = w1_ref.dtype  # MXU input dtype (f32 or bf16); accumulation is always f32.
    x = x_ref[...].astype(cd)
    # fc1 + relu   (bias add / ReLU in f32: v5e has no bf16 VPU datapath)
    h = jnp.dot(x, w1_ref[...], preferred_element_type=jnp.float32)
    h = jnp.maximum(h + b1_ref[...], 0.0)
    # fc2 + relu
    h = jnp.dot(h.astype(cd), w2_ref[...], preferred_element_type=jnp.float32)
    h = jnp.maximum(h + b2_ref[...], 0.0)
    # fc3 + relu
    h = jnp.dot(h.astype(cd), w3_ref[...], preferred_element_type=jnp.float32)
    h = jnp.maximum(h + b3_ref[...], 0.0)
    # fc4 (no activation)
    h = jnp.dot(h.astype(cd), w4_ref[...], preferred_element_type=jnp.float32)
    o_ref[...] = (h + b4_ref[...]).astype(o_ref.dtype)


@functools.partial(jax.jit, static_argnames=("out_dim", "block_b"))
def mlp_forward(x, kernel_params, *, out_dim, block_b=256):
    """x: [B, input_size] f32; kernel_params: flat tuple from prepare_params()."""
    (w1, b1, w2, b2, w3, b3, w4, b4) = kernel_params
    B, in_dim = x.shape
    f_out = w4.shape[1]          # lane-padded output width (multiple of 128)

    # Batch tile: multiple of 8 (sublane), capped at block_b; pad B up to a
    # whole number of tiles so every grid step sees a full (tb, ...) block.
    tb = min(block_b, _round_up(B, 8))
    bp = _round_up(B, tb)
    if bp != B:
        x = jnp.pad(x, ((0, bp - B), (0, 0)))

    const = lambda i: (0, 0)     # weights/biases: same block every grid step
    out = pl.pallas_call(
        _mlp_kernel,
        out_shape=jax.ShapeDtypeStruct((bp, f_out), jnp.float32),
        grid=(bp // tb,),
        in_specs=[
            pl.BlockSpec((tb, in_dim), lambda i: (i, 0)),
            pl.BlockSpec(w1.shape, const), pl.BlockSpec(b1.shape, const),
            pl.BlockSpec(w2.shape, const), pl.BlockSpec(b2.shape, const),
            pl.BlockSpec(w3.shape, const), pl.BlockSpec(b3.shape, const),
            pl.BlockSpec(w4.shape, const), pl.BlockSpec(b4.shape, const),
        ],
        out_specs=pl.BlockSpec((tb, f_out), lambda i: (i, 0)),
        compiler_params=pltpu.CompilerParams(
            dimension_semantics=("parallel",)),   # megacore sharding on v7x
    )(x, w1, b1, w2, b2, w3, b3, w4, b4)
    return out[:B, :out_dim]


def init_params(key, input_size, output_size):
    """Raw params mirroring nn.Linear: W is [out_features, in_features], b is [out_features]."""
    dims = [(input_size, 64), (64, 64), (64, 32), (32, output_size)]
    names = ["fc1", "fc2", "fc3", "fc4"]
    params = {}
    for name, (fan_in, fan_out) in zip(names, dims):
        key, kw, kb = jax.random.split(key, 3)
        bound = 1.0 / (fan_in ** 0.5)  # PyTorch default uniform bound
        w = jax.random.uniform(kw, (fan_out, fan_in), jnp.float32, -bound, bound)
        b = jax.random.uniform(kb, (fan_out,), jnp.float32, -bound, bound)
        params[name] = (w, b)
    return params


def prepare_params(raw, compute_dtype=jnp.float32):
    """Transpose to [in, out], zero-pad every output feature dim to a multiple of 128
    (lane-dense), and cast weights to `compute_dtype`. Biases stay f32 (zero-padded)."""
    flat = []
    for i, name in enumerate(["fc1", "fc2", "fc3", "fc4"]):
        w, b = raw[name]
        out_f, in_f = w.shape
        in_p = in_f if i == 0 else _round_up(in_f, LANE)   # match previous layer's padding
        out_p = _round_up(out_f, LANE)
        wp = jnp.zeros((in_p, out_p), jnp.float32).at[:in_f, :out_f].set(w.T)
        bp = jnp.zeros((1, out_p), jnp.float32).at[0, :out_f].set(b)
        flat += [wp.astype(compute_dtype), bp]
    return tuple(flat)


def reference_forward(x, raw, compute_dtype=jnp.float32):
    """Pure-JAX reference matching the PyTorch module (and the kernel's MXU input dtype)."""
    h = x
    for name, act in (("fc1", True), ("fc2", True), ("fc3", True), ("fc4", False)):
        w, b = raw[name]
        h = jnp.dot(h.astype(compute_dtype), w.T.astype(compute_dtype),
                    preferred_element_type=jnp.float32) + b
        if act:
            h = jnp.maximum(h, 0.0)
    return h


if __name__ == "__main__":
    key = jax.random.PRNGKey(0)
    input_size, output_size = 16, 8

    kx, kp, kx2 = jax.random.split(key, 3)
    raw_params = init_params(kp, input_size, output_size)

    # --- small batch, f32 weights: exact nn.Module semantics ---
    x_small = jax.random.normal(kx, (2, input_size), jnp.float32)
    p_f32 = prepare_params(raw_params, jnp.float32)
    out = jax.block_until_ready(mlp_forward(x_small, p_f32, out_dim=output_size))
    ref = reference_forward(x_small, raw_params, jnp.float32)
    assert out.shape == (2, output_size)
    assert jnp.allclose(out, ref, atol=2e-5, rtol=2e-5), float(jnp.max(jnp.abs(out - ref)))

    # --- larger batch, bf16 MXU inputs (f32 accumulation), tiled grid of 4 ---
    x_big = jax.random.normal(kx2, (1024, input_size), jnp.float32)
    p_bf16 = prepare_params(raw_params, jnp.bfloat16)
    out_b = jax.block_until_ready(
        mlp_forward(x_big, p_bf16, out_dim=output_size, block_b=256))
    ref_b = reference_forward(x_big, raw_params, jnp.bfloat16)
    assert out_b.shape == (1024, output_size)
    assert jnp.allclose(out_b, ref_b, atol=1e-2, rtol=1e-2), \
        float(jnp.max(jnp.abs(out_b - ref_b)))

    print("KERNEL_OK")
</pallas_src>

<mosaic_0001>
module attributes {stable_mosaic.version = 11 : i64} {
  func.func @_mlp_kernel(%arg0: i32, %arg1: memref<8x16xf32, #tpu.memory_space<vmem>>, %arg2: memref<16x128xf32, #tpu.memory_space<vmem>>, %arg3: memref<1x128xf32, #tpu.memory_space<vmem>>, %arg4: memref<128x128xf32, #tpu.memory_space<vmem>>, %arg5: memref<1x128xf32, #tpu.memory_space<vmem>>, %arg6: memref<128x128xf32, #tpu.memory_space<vmem>>, %arg7: memref<1x128xf32, #tpu.memory_space<vmem>>, %arg8: memref<128x128xf32, #tpu.memory_space<vmem>>, %arg9: memref<1x128xf32, #tpu.memory_space<vmem>>, %arg10: memref<8x128xf32, #tpu.memory_space<vmem>>) attributes {dimension_semantics = [#tpu.dimension_semantics<parallel>], iteration_bounds = array<i64: 1>, scalar_prefetch = 0 : i64, scratch_operands = 0 : i64, tpu.core_type = #tpu.core_type<tc>, window_params = [{transform_indices = @transform_0, window_bounds = array<i64: 8, 16>}, {pipeline_mode = #tpu.pipeline_mode<synchronous>, transform_indices = @transform_1, window_bounds = array<i64: 16, 128>}, {pipeline_mode = #tpu.pipeline_mode<synchronous>, transform_indices = @transform_2, window_bounds = array<i64: 1, 128>}, {pipeline_mode = #tpu.pipeline_mode<synchronous>, transform_indices = @transform_3, window_bounds = array<i64: 128, 128>}, {pipeline_mode = #tpu.pipeline_mode<synchronous>, transform_indices = @transform_4, window_bounds = array<i64: 1, 128>}, {pipeline_mode = #tpu.pipeline_mode<synchronous>, transform_indices = @transform_5, window_bounds = array<i64: 128, 128>}, {pipeline_mode = #tpu.pipeline_mode<synchronous>, transform_indices = @transform_6, window_bounds = array<i64: 1, 128>}, {pipeline_mode = #tpu.pipeline_mode<synchronous>, transform_indices = @transform_7, window_bounds = array<i64: 128, 128>}, {pipeline_mode = #tpu.pipeline_mode<synchronous>, transform_indices = @transform_8, window_bounds = array<i64: 1, 128>}, {transform_indices = @transform_9, window_bounds = array<i64: 8, 128>}]} {
    %c0 = arith.constant 0 : index
    %c0_0 = arith.constant 0 : index
    %0 = vector.load %arg1[%c0, %c0_0] : memref<8x16xf32, #tpu.memory_space<vmem>>, vector<8x16xf32>
    %c0_1 = arith.constant 0 : index
    %c0_2 = arith.constant 0 : index
    %1 = vector.load %arg2[%c0_1, %c0_2] : memref<16x128xf32, #tpu.memory_space<vmem>>, vector<16x128xf32>
    %cst = arith.constant dense<0.000000e+00> : vector<8x128xf32>
    %2 = tpu.matmul %0, %1, %cst {dimension_numbers = #tpu.dot_dimension_numbers<[1], [0], [0], [1], [0, 0, 1, 1], [], []>} : vector<8x16xf32>, vector<16x128xf32>, vector<8x128xf32> -> vector<8x128xf32>
    %c0_3 = arith.constant 0 : index
    %c0_4 = arith.constant 0 : index
    %3 = vector.load %arg3[%c0_3, %c0_4] : memref<1x128xf32, #tpu.memory_space<vmem>>, vector<1x128xf32>
    %4 = vector.broadcast %3 : vector<1x128xf32> to vector<8x128xf32>
    %5 = arith.addf %2, %4 : vector<8x128xf32>
    %cst_5 = arith.constant 0.000000e+00 : f32
    %6 = vector.broadcast %cst_5 : f32 to vector<8x128xf32>
    %7 = arith.maximumf %5, %6 : vector<8x128xf32>
    %c0_6 = arith.constant 0 : index
    %c0_7 = arith.constant 0 : index
    %8 = vector.load %arg4[%c0_6, %c0_7] : memref<128x128xf32, #tpu.memory_space<vmem>>, vector<128x128xf32>
    %cst_8 = arith.constant dense<0.000000e+00> : vector<8x128xf32>
    %9 = tpu.matmul %7, %8, %cst_8 {dimension_numbers = #tpu.dot_dimension_numbers<[1], [0], [0], [1], [0, 0, 1, 1], [], []>} : vector<8x128xf32>, vector<128x128xf32>, vector<8x128xf32> -> vector<8x128xf32>
    %c0_9 = arith.constant 0 : index
    %c0_10 = arith.constant 0 : index
    %10 = vector.load %arg5[%c0_9, %c0_10] : memref<1x128xf32, #tpu.memory_space<vmem>>, vector<1x128xf32>
    %11 = vector.broadcast %10 : vector<1x128xf32> to vector<8x128xf32>
    %12 = arith.addf %9, %11 : vector<8x128xf32>
    %cst_11 = arith.constant 0.000000e+00 : f32
    %13 = vector.broadcast %cst_11 : f32 to vector<8x128xf32>
    %14 = arith.maximumf %12, %13 : vector<8x128xf32>
    %c0_12 = arith.constant 0 : index
    %c0_13 = arith.constant 0 : index
    %15 = vector.load %arg6[%c0_12, %c0_13] : memref<128x128xf32, #tpu.memory_space<vmem>>, vector<128x128xf32>
    %cst_14 = arith.constant dense<0.000000e+00> : vector<8x128xf32>
    %16 = tpu.matmul %14, %15, %cst_14 {dimension_numbers = #tpu.dot_dimension_numbers<[1], [0], [0], [1], [0, 0, 1, 1], [], []>} : vector<8x128xf32>, vector<128x128xf32>, vector<8x128xf32> -> vector<8x128xf32>
    %c0_15 = arith.constant 0 : index
    %c0_16 = arith.constant 0 : index
    %17 = vector.load %arg7[%c0_15, %c0_16] : memref<1x128xf32, #tpu.memory_space<vmem>>, vector<1x128xf32>
    %18 = vector.broadcast %17 : vector<1x128xf32> to vector<8x128xf32>
    %19 = arith.addf %16, %18 : vector<8x128xf32>
    %cst_17 = arith.constant 0.000000e+00 : f32
    %20 = vector.broadcast %cst_17 : f32 to vector<8x128xf32>
    %21 = arith.maximumf %19, %20 : vector<8x128xf32>
    %c0_18 = arith.constant 0 : index
    %c0_19 = arith.constant 0 : index
    %22 = vector.load %arg8[%c0_18, %c0_19] : memref<128x128xf32, #tpu.memory_space<vmem>>, vector<128x128xf32>
    %cst_20 = arith.constant dense<0.000000e+00> : vector<8x128xf32>
    %23 = tpu.matmul %21, %22, %cst_20 {dimension_numbers = #tpu.dot_dimension_numbers<[1], [0], [0], [1], [0, 0, 1, 1], [], []>} : vector<8x128xf32>, vector<128x128xf32>, vector<8x128xf32> -> vector<8x128xf32>
    %c0_21 = arith.constant 0 : index
    %c0_22 = arith.constant 0 : index
    %24 = vector.load %arg9[%c0_21, %c0_22] : memref<1x128xf32, #tpu.memory_space<vmem>>, vector<1x128xf32>
    %25 = vector.broadcast %24 : vector<1x128xf32> to vector<8x128xf32>
    %26 = arith.addf %23, %25 : vector<8x128xf32>
    %c0_23 = arith.constant 0 : index
    %c0_24 = arith.constant 0 : index
    %27 = vector.load %arg10[%c0_23, %c0_24] : memref<8x128xf32, #tpu.memory_space<vmem>>, vector<8x128xf32>
    tpu.vector_store %arg10[%c0_23, %c0_24], %26 {strides = array<i32>} : memref<8x128xf32, #tpu.memory_space<vmem>>, vector<8x128xf32>,
    return
  }
  func.func @transform_0(%arg0: i32) -> (i32, i32) {
    %c0_i32 = arith.constant 0 : i32
    %c0_i32_0 = arith.constant 0 : i32
    return %arg0, %c0_i32 : i32, i32
  }
  func.func @transform_1(%arg0: i32) -> (i32, i32) {
    %c0_i32 = arith.constant 0 : i32
    %c0_i32_0 = arith.constant 0 : i32
    %c0_i32_1 = arith.constant 0 : i32
    return %c0_i32, %c0_i32_0 : i32, i32
  }
  func.func @transform_2(%arg0: i32) -> (i32, i32) {
    %c0_i32 = arith.constant 0 : i32
    %c0_i32_0 = arith.constant 0 : i32
    %c0_i32_1 = arith.constant 0 : i32
    return %c0_i32, %c0_i32_0 : i32, i32
  }
  func.func @transform_3(%arg0: i32) -> (i32, i32) {
    %c0_i32 = arith.constant 0 : i32
    %c0_i32_0 = arith.constant 0 : i32
    %c0_i32_1 = arith.constant 0 : i32
    return %c0_i32, %c0_i32_0 : i32, i32
  }
  func.func @transform_4(%arg0: i32) -> (i32, i32) {
    %c0_i32 = arith.constant 0 : i32
    %c0_i32_0 = arith.constant 0 : i32
    %c0_i32_1 = arith.constant 0 : i32
    return %c0_i32, %c0_i32_0 : i32, i32
  }
  func.func @transform_5(%arg0: i32) -> (i32, i32) {
    %c0_i32 = arith.constant 0 : i32
    %c0_i32_0 = arith.constant 0 : i32
    %c0_i32_1 = arith.constant 0 : i32
    return %c0_i32, %c0_i32_0 : i32, i32
  }
  func.func @transform_6(%arg0: i32) -> (i32, i32) {
    %c0_i32 = arith.constant 0 : i32
    %c0_i32_0 = arith.constant 0 : i32
    %c0_i32_1 = arith.constant 0 : i32
    return %c0_i32, %c0_i32_0 : i32, i32
  }
  func.func @transform_7(%arg0: i32) -> (i32, i32) {
    %c0_i32 = arith.constant 0 : i32
    %c0_i32_0 = arith.constant 0 : i32
    %c0_i32_1 = arith.constant 0 : i32
    return %c0_i32, %c0_i32_0 : i32, i32
  }
  func.func @transform_8(%arg0: i32) -> (i32, i32) {
    %c0_i32 = arith.constant 0 : i32
    %c0_i32_0 = arith.constant 0 : i32
    %c0_i32_1 = arith.constant 0 : i32
    return %c0_i32, %c0_i32_0 : i32, i32
  }
  func.func @transform_9(%arg0: i32) -> (i32, i32) {
    %c0_i32 = arith.constant 0 : i32
    %c0_i32_0 = arith.constant 0 : i32
    return %arg0, %c0_i32 : i32, i32
  }
}

</mosaic_0001>

<llo_original>
// kernel: mlp_forward.1
$region0: #{mlp_forward.1}
  #allocation0 [shape = 'u32[]', space=smem, size = 0x4, offset = 0x4, fixed_abs, tag = 'smem constant byte address 0x4 - core index']
  #allocation1 [shape = 'u32[144,128]{1,0:T(1,128)}', space=vmem, size = 0x12000, scoped, tag = 'internal scratch']
  %s0 = inlined_call_operand.vmem [shape: f32[8,16], index: 0, kind: input, shape index: {}]
  %s1 = inlined_call_operand.hbm [shape: f32[16,128], index: 1, kind: input, shape index: {}]
  %s2 = inlined_call_operand.vmem [shape: f32[1,128], index: 2, kind: input, shape index: {}]
  %s3 = inlined_call_operand.hbm [shape: f32[128,128], index: 3, kind: input, shape index: {}]
  %s4 = inlined_call_operand.vmem [shape: f32[1,128], index: 4, kind: input, shape index: {}]
  %s5 = inlined_call_operand.hbm [shape: f32[128,128], index: 5, kind: input, shape index: {}]
  %s6 = inlined_call_operand.vmem [shape: f32[1,128], index: 6, kind: input, shape index: {}]
  %s7 = inlined_call_operand.hbm [shape: f32[128,128], index: 7, kind: input, shape index: {}]
  %s8 = inlined_call_operand.vmem [shape: f32[1,128], index: 8, kind: input, shape index: {}]
  %s9 = inlined_call_operand.vmem [shape: f32[8,128], index: 9, kind: output, shape index: {}]
  %s10 = sld [smem:[#allocation0]]
  $region62: #{mlp_forward.1} parent=0
    _
  %s12 = ssub.s32 1, %s10
  %s13 = scalar_select 0, %s12, %s10
  $region1: #{mlp_forward.1} parent=0
    #allocation2 [shape = 'u8[8192]{0}', space=vmem, size = 0x2000, scoped, tag = 'input window, operand 1, single buffered']
    #allocation3 [shape = 's32[1]{0}', space=sflag, size = 0x4, scoped, tag = 'scoped memory for mlp_forward.1']
    #allocation4 [shape = 'u8[65536]{0}', space=vmem, size = 0x10000, scoped, tag = 'input window, operand 3, single buffered']
    #allocation5 [shape = 's32[1]{0}', space=sflag, size = 0x4, scoped, tag = 'scoped memory for mlp_forward.1']
    #allocation6 [shape = 'u8[65536]{0}', space=vmem, size = 0x10000, scoped, tag = 'input window, operand 5, single buffered']
    #allocation7 [shape = 'u8[65536]{0}', space=vmem, size = 0x10000, scoped, tag = 'input window, operand 7, single buffered']
    #allocation8 [shape = 's32[1]{0}', space=sflag, size = 0x4, scoped, tag = 'scoped memory for mlp_forward.1']
    %14 = vsyncpa [#allocation3], 0
    %15 = vsyncpa [#allocation5], 0
    %16 = vsyncpa [#allocation8], 0
    // Predicated region
    $region2: #{mlp_forward.1} parent=1 // pred_check
      _
    $region3: #{mlp_forward.1} parent=1 // pred_check_branch
      %18 = sbr.rel (0) target = $region5
    $region4: #{mlp_forward.1} parent=1 // pred_region
      _
    $region5: #{mlp_forward.1} parent=1 // pred_fallthru
      _
    // Predicated region
    $region6: #{mlp_forward.1} parent=1 // pred_check
      _
    $region7: #{mlp_forward.1} parent=1 // pred_check_branch
      %20 = sbr.rel (0) target = $region9
    $region8: #{mlp_forward.1} parent=1 // pred_region
      %s22 = ssub.s32 256, 256
      %23 = vsyncadd [#allocation3], %s22
      %s24 = sshll.u32 [#allocation2], 4
      %s25 = int_to_ptr.vmem [resolvable:$true] %s24
      %30 = dma.hbm_to_vmem [thread:$0]  %s1, 256, %s25, [#allocation3], 128, 128, 8
    $region9: #{mlp_forward.1} parent=1 // pred_fallthru
      _
    // Predicated region
    $region10: #{mlp_forward.1} parent=1 // pred_check
      _
    $region11: #{mlp_forward.1} parent=1 // pred_check_branch
      %32 = sbr.rel (0) target = $region13
    $region12: #{mlp_forward.1} parent=1 // pred_region
      _
    $region13: #{mlp_forward.1} parent=1 // pred_fallthru
      _
    // Predicated region
    $region14: #{mlp_forward.1} parent=1 // pred_check
      _
    $region15: #{mlp_forward.1} parent=1 // pred_check_branch
      %34 = sbr.rel (0) target = $region17
    $region16: #{mlp_forward.1} parent=1 // pred_region
      %s36 = ssub.s32 2048, 2048
      %37 = vsyncadd [#allocation5], %s36
      %s38 = sshll.u32 [#allocation4], 4
      %s39 = int_to_ptr.vmem [resolvable:$true] %s38
      %44 = dma.hbm_to_vmem [thread:$0]  %s3, 2048, %s39, [#allocation5], 128, 128, 8
    $region17: #{mlp_forward.1} parent=1 // pred_fallthru
      _
    // Predicated region
    $region18: #{mlp_forward.1} parent=1 // pred_check
      _
    $region19: #{mlp_forward.1} parent=1 // pred_check_branch
      %46 = sbr.rel (0) target = $region21
    $region20: #{mlp_forward.1} parent=1 // pred_region
      _
    $region21: #{mlp_forward.1} parent=1 // pred_fallthru
      _
    // Predicated region
    $region22: #{mlp_forward.1} parent=1 // pred_check
      _
    $region23: #{mlp_forward.1} parent=1 // pred_check_branch
      %48 = sbr.rel (0) target = $region25
    $region24: #{mlp_forward.1} parent=1 // pred_region
      %s50 = ssub.s32 2048, 2048
      %51 = vsyncadd [#allocation5], %s50
      %s52 = sshll.u32 [#allocation6], 4
      %s53 = int_to_ptr.vmem [resolvable:$true] %s52
      %58 = dma.hbm_to_vmem [thread:$0]  %s5, 2048, %s53, [#allocation5], 128, 128, 8
    $region25: #{mlp_forward.1} parent=1 // pred_fallthru
      _
    // Predicated region
    $region26: #{mlp_forward.1} parent=1 // pred_check
      _
    $region27: #{mlp_forward.1} parent=1 // pred_check_branch
      %60 = sbr.rel (0) target = $region29
    $region28: #{mlp_forward.1} parent=1 // pred_region
      _
    $region29: #{mlp_forward.1} parent=1 // pred_fallthru
      _
    // Predicated region
    $region30: #{mlp_forward.1} parent=1 // pred_check
      _
    $region31: #{mlp_forward.1} parent=1 // pred_check_branch
      %62 = sbr.rel (0) target = $region33
    $region32: #{mlp_forward.1} parent=1 // pred_region
      %s64 = ssub.s32 2048, 2048
      %65 = vsyncadd [#allocation8], %s64
      %s66 = sshll.u32 [#allocation7], 4
      %s67 = int_to_ptr.vmem [resolvable:$true] %s66
      %72 = dma.hbm_to_vmem [thread:$0]  %s7, 2048, %s67, [#allocation8], 128, 128, 8
    $region33: #{mlp_forward.1} parent=1 // pred_fallthru
      _
    // Predicated region
    $region34: #{mlp_forward.1} parent=1 // pred_check
      _
    $region35: #{mlp_forward.1} parent=1 // pred_check_branch
      %74 = sbr.rel (0) target = $region37
    $region36: #{mlp_forward.1} parent=1 // pred_region
      _
    $region37: #{mlp_forward.1} parent=1 // pred_fallthru
      _
    // Predicated region
    $region38: #{mlp_forward.1} parent=1 // pred_check
      _
    $region39: #{mlp_forward.1} parent=1 // pred_check_branch
      %76 = sbr.rel (0) target = $region41
    $region40: #{mlp_forward.1} parent=1 // pred_region
      %77 = dma.done [#allocation3], 256
    $region41: #{mlp_forward.1} parent=1 // pred_fallthru
      _
    // Predicated region
    $region42: #{mlp_forward.1} parent=1 // pred_check
      _
    $region43: #{mlp_forward.1} parent=1 // pred_check_branch
      %79 = sbr.rel (0) target = $region45
    $region44: #{mlp_forward.1} parent=1 // pred_region
      %80 = dma.done [#allocation5], 2048
    $region45: #{mlp_forward.1} parent=1 // pred_fallthru
      _
    // Predicated region
    $region46: #{mlp_forward.1} parent=1 // pred_check
      _
    $region47: #{mlp_forward.1} parent=1 // pred_check_branch
      %82 = sbr.rel (0) target = $region49
    $region48: #{mlp_forward.1} parent=1 // pred_region
      %83 = dma.done [#allocation5], 2048
    $region49: #{mlp_forward.1} parent=1 // pred_fallthru
      _
    // Predicated region
    $region50: #{mlp_forward.1} parent=1 // pred_check
      _
    $region51: #{mlp_forward.1} parent=1 // pred_check_branch
      %85 = sbr.rel (0) target = $region53
    $region52: #{mlp_forward.1} parent=1 // pred_region
      %86 = dma.done [#allocation8], 2048
    $region53: #{mlp_forward.1} parent=1 // pred_fallthru
      _
    %v87 = vld [vmem:[%s0] sm:$0xff]
    %v88 = vld [vmem:[#allocation2] sm:$0xff]
    %v89 = vld [vmem:[#allocation2 + $0x8] sm:$0xff]
    %v90 = vld [vmem:[%s2] sm:$0x1]
    %v92 = vlaneseq
    %v93 = vshrl.u32 %v92, 7
    %v94 = vsub.s32 0, %v93
    %v95 = vrot.slane %v90, %v94
    %vm97 = vcmask 130048
    %v99 = vsel %vm97, %v87, 0
    %101 = vmatprep.subr.mxu0 0.0
    %102 = vmatpush1.msra.mxu0 0.0
    %103 = vmatprep.subr.mxu0 0.0
    %104 = vmatpush1.msra.mxu0 0.0
    %105 = vmatprep.subr.mxu0 0.0
    %106 = vmatpush1.msra.mxu0 0.0
    %107 = vmatprep.subr.mxu0 0.0
    %108 = vmatpush1.msra.mxu0 0.0
    %109 = vmatprep.subr.mxu0 0.0
    %110 = vmatpush1.msra.mxu0 0.0
    %111 = vmatprep.subr.mxu0 0.0
    %112 = vmatpush1.msra.mxu0 0.0
    %113 = vmatprep.subr.mxu0 0.0
    %114 = vmatpush1.msra.mxu0 0.0
    %115 = vmatprep.subr.mxu0 0.0
    %116 = vmatpush1.msra.mxu0 0.0
    %117 = vmatprep.subr.mxu0 0.0
    %118 = vmatpush1.msra.mxu0 0.0
    %119 = vmatprep.subr.mxu0 0.0
    %120 = vmatpush1.msra.mxu0 0.0
    %121 = vmatprep.subr.mxu0 0.0
    %122 = vmatpush1.msra.mxu0 0.0
    %123 = vmatprep.subr.mxu0 0.0
    %124 = vmatpush1.msra.mxu0 0.0
    %125 = vmatprep.subr.mxu0 0.0
    %126 = vmatpush1.msra.mxu0 0.0
    %127 = vmatprep.subr.mxu0 0.0
    %128 = vmatpush1.msra.mxu0 0.0
    %129 = vmatprep.subr.mxu0 0.0
    %130 = vmatpush1.msra.mxu0 %v89
    %131 = vmatprep.subr.mxu0 0.0
    %132 = vmatpush1.msra.mxu0 %v88
    %133 = vmatprep.subr.mxu0 0.0
    %134 = vmatpush2.msra.mxu0 0.0
    %135 = vmatprep.subr.mxu0 0.0
    %136 = vmatpush2.msra.mxu0 0.0
    %137 = vmatprep.subr.mxu0 0.0
    %138 = vmatpush2.msra.mxu0 0.0
    %139 = vmatprep.subr.mxu0 0.0
    %140 = vmatpush2.msra.mxu0 0.0
    %141 = vmatprep.subr.mxu0 0.0
    %142 = vmatpush2.msra.mxu0 0.0
    %143 = vmatprep.subr.mxu0 0.0
    %144 = vmatpush2.msra.mxu0 0.0
    %145 = vmatprep.subr.mxu0 0.0
    %146 = vmatpush2.msra.mxu0 0.0
    %147 = vmatprep.subr.mxu0 0.0
    %148 = vmatpush2.msra.mxu0 0.0
    %149 = vmatprep.subr.mxu0 0.0
    %150 = vmatpush2.msra.mxu0 0.0
    %151 = vmatprep.subr.mxu0 0.0
    %152 = vmatpush2.msra.mxu0 0.0
    %153 = vmatprep.subr.mxu0 0.0
    %154 = vmatpush2.msra.mxu0 0.0
    %155 = vmatprep.subr.mxu0 0.0
    %156 = vmatpush2.msra.mxu0 0.0
    %157 = vmatprep.subr.mxu0 0.0
    %158 = vmatpush2.msra.mxu0 0.0
    %159 = vmatprep.subr.mxu0 0.0
    %160 = vmatpush2.msra.mxu0 0.0
    %161 = vmatprep.subr.mxu0 0.0
    %162 = vmatpush2.msra.mxu0 0.0
    %163 = vmatprep.subr.mxu0 0.0
    %164 = vmatpush2.msra.mxu0 0.0
    %165 = vmatprep.mubr.f32.mxu0 0.0
    %166 = vmatmul.mubr.f32.gmra.mxu0 %v99
    %v167 = vpop.f32.mrf.mxu0
    %v168 = vadd.f32 %v95, %v167
    %v169 = vpop.f32.mrf.mxu0
    %170 = vdwg.mxu0
    %v171 = vmax.f32 %v168, 0.0
    %v172 = vld [vmem:[#allocation4] sm:$0xff]
    %v173 = vld [vmem:[#allocation4 + $0x8] sm:$0xff]
    %v174 = vld [vmem:[#allocation4 + $0x10] sm:$0xff]
    %v175 = vld [vmem:[#allocation4 + $0x18] sm:$0xff]
    %v176 = vld [vmem:[#allocation4 + $0x20] sm:$0xff]
    %v177 = vld [vmem:[#allocation4 + $0x28] sm:$0xff]
    %v178 = vld [vmem:[#allocation4 + $0x30] sm:$0xff]
    %v179 = vld [vmem:[#allocation4 + $0x38] sm:$0xff]
    %v180 = vld [vmem:[#allocation4 + $0x40] sm:$0xff]
    %v181 = vld [vmem:[#allocation4 + $0x48] sm:$0xff]
    %v182 = vld [vmem:[#allocation4 + $0x50] sm:$0xff]
    %v183 = vld [vmem:[#allocation4 + $0x58] sm:$0xff]
    %v184 = vld [vmem:[#allocation4 + $0x60] sm:$0xff]
    %v185 = vld [vmem:[#allocation4 + $0x68] sm:$0xff]
    %v186 = vld [vmem:[#allocation4 + $0x70] sm:$0xff]
    %v187 = vld [vmem:[#allocation4 + $0x78] sm:$0xff]
    %v188 = vld [vmem:[%s4] sm:$0x1]
    %v190 = vlaneseq
    %v191 = vshrl.u32 %v190, 7
    %v192 = vsub.s32 0, %v191
    %v193 = vrot.slane %v188, %v192
    %195 = vmatprep.subr.mxu0 0.0
    %196 = vmatpush1.msra.mxu0 %v187
    %197 = vmatprep.subr.mxu0 0.0
    %198 = vmatpush1.msra.mxu0 %v186
    %199 = vmatprep.subr.mxu0 0.0
    %200 = vmatpush1.msra.mxu0 %v185
    %201 = vmatprep.subr.mxu0 0.0
    %202 = vmatpush1.msra.mxu0 %v184
    %203 = vmatprep.subr.mxu0 0.0
    %204 = vmatpush1.msra.mxu0 %v183
    %205 = vmatprep.subr.mxu0 0.0
    %206 = vmatpush1.msra.mxu0 %v182
    %207 = vmatprep.subr.mxu0 0.0
    %208 = vmatpush1.msra.mxu0 %v181
    %209 = vmatprep.subr.mxu0 0.0
    %210 = vmatpush1.msra.mxu0 %v180
    %211 = vmatprep.subr.mxu0 0.0
    %212 = vmatpush1.msra.mxu0 %v179
    %213 = vmatprep.subr.mxu0 0.0
    %214 = vmatpush1.msra.mxu0 %v178
    %215 = vmatprep.subr.mxu0 0.0
    %216 = vmatpush1.msra.mxu0 %v177
    %217 = vmatprep.subr.mxu0 0.0
    %218 = vmatpush1.msra.mxu0 %v176
    %219 = vmatprep.subr.mxu0 0.0
    %220 = vmatpush1.msra.mxu0 %v175
    %221 = vmatprep.subr.mxu0 0.0
    %222 = vmatpush1.msra.mxu0 %v174
    %223 = vmatprep.subr.mxu0 0.0
    %224 = vmatpush1.msra.mxu0 %v173
    %225 = vmatprep.subr.mxu0 0.0
    %226 = vmatpush1.msra.mxu0 %v172
    %227 = vmatprep.subr.mxu0 0.0
    %228 = vmatpush2.msra.mxu0 0.0
    %229 = vmatprep.subr.mxu0 0.0
    %230 = vmatpush2.msra.mxu0 0.0
    %231 = vmatprep.subr.mxu0 0.0
    %232 = vmatpush2.msra.mxu0 0.0
    %233 = vmatprep.subr.mxu0 0.0
    %234 = vmatpush2.msra.mxu0 0.0
    %235 = vmatprep.subr.mxu0 0.0
    %236 = vmatpush2.msra.mxu0 0.0
    %237 = vmatprep.subr.mxu0 0.0
    %238 = vmatpush2.msra.mxu0 0.0
    %239 = vmatprep.subr.mxu0 0.0
    %240 = vmatpush2.msra.mxu0 0.0
    %241 = vmatprep.subr.mxu0 0.0
    %242 = vmatpush2.msra.mxu0 0.0
    %243 = vmatprep.subr.mxu0 0.0
    %244 = vmatpush2.msra.mxu0 0.0
    %245 = vmatprep.subr.mxu0 0.0
    %246 = vmatpush2.msra.mxu0 0.0
    %247 = vmatprep.subr.mxu0 0.0
    %248 = vmatpush2.msra.mxu0 0.0
    %249 = vmatprep.subr.mxu0 0.0
    %250 = vmatpush2.msra.mxu0 0.0
    %251 = vmatprep.subr.mxu0 0.0
    %252 = vmatpush2.msra.mxu0 0.0
    %253 = vmatprep.subr.mxu0 0.0
    %254 = vmatpush2.msra.mxu0 0.0
    %255 = vmatprep.subr.mxu0 0.0
    %256 = vmatpush2.msra.mxu0 0.0
    %257 = vmatprep.subr.mxu0 0.0
    %258 = vmatpush2.msra.mxu0 0.0
    %259 = vmatprep.mubr.f32.mxu0 0.0
    %260 = vmatmul.mubr.f32.gmra.mxu0 %v171
    %v261 = vpop.f32.mrf.mxu0
    %v262 = vadd.f32 %v193, %v261
    %v263 = vpop.f32.mrf.mxu0
    %264 = vdwg.mxu0
    %v265 = vmax.f32 %v262, 0.0
    %v266 = vld [vmem:[#allocation6] sm:$0xff]
    %v267 = vld [vmem:[#allocation6 + $0x8] sm:$0xff]
    %v268 = vld [vmem:[#allocation6 + $0x10] sm:$0xff]
    %v269 = vld [vmem:[#allocation6 + $0x18] sm:$0xff]
    %v270 = vld [vmem:[#allocation6 + $0x20] sm:$0xff]
    %v271 = vld [vmem:[#allocation6 + $0x28] sm:$0xff]
    %v272 = vld [vmem:[#allocation6 + $0x30] sm:$0xff]
    %v273 = vld [vmem:[#allocation6 + $0x38] sm:$0xff]
    %v274 = vld [vmem:[#allocation6 + $0x40] sm:$0xff]
    %v275 = vld [vmem:[#allocation6 + $0x48] sm:$0xff]
    %v276 = vld [vmem:[#allocation6 + $0x50] sm:$0xff]
    %v277 = vld [vmem:[#allocation6 + $0x58] sm:$0xff]
    %v278 = vld [vmem:[#allocation6 + $0x60] sm:$0xff]
    %v279 = vld [vmem:[#allocation6 + $0x68] sm:$0xff]
    %v280 = vld [vmem:[#allocation6 + $0x70] sm:$0xff]
    %v281 = vld [vmem:[#allocation6 + $0x78] sm:$0xff]
    %v282 = vld [vmem:[%s6] sm:$0x1]
    %v284 = vlaneseq
    %v285 = vshrl.u32 %v284, 7
    %v286 = vsub.s32 0, %v285
    %v287 = vrot.slane %v282, %v286
    %289 = vmatprep.subr.mxu0 0.0
    %290 = vmatpush1.msra.mxu0 %v281
    %291 = vmatprep.subr.mxu0 0.0
    %292 = vmatpush1.msra.mxu0 %v280
    %293 = vmatprep.subr.mxu0 0.0
    %294 = vmatpush1.msra.mxu0 %v279
    %295 = vmatprep.subr.mxu0 0.0
    %296 = vmatpush1.msra.mxu0 %v278
    %297 = vmatprep.subr.mxu0 0.0
    %298 = vmatpush1.msra.mxu0 %v277
    %299 = vmatprep.subr.mxu0 0.0
    %300 = vmatpush1.msra.mxu0 %v276
    %301 = vmatprep.subr.mxu0 0.0
    %302 = vmatpush1.msra.mxu0 %v275
    %303 = vmatprep.subr.mxu0 0.0
    %304 = vmatpush1.msra.mxu0 %v274
    %305 = vmatprep.subr.mxu0 0.0
    %306 = vmatpush1.msra.mxu0 %v273
    %307 = vmatprep.subr.mxu0 0.0
    %308 = vmatpush1.msra.mxu0 %v272
    %309 = vmatprep.subr.mxu0 0.0
    %310 = vmatpush1.msra.mxu0 %v271
    %311 = vmatprep.subr.mxu0 0.0
    %312 = vmatpush1.msra.mxu0 %v270
    %313 = vmatprep.subr.mxu0 0.0
    %314 = vmatpush1.msra.mxu0 %v269
    %315 = vmatprep.subr.mxu0 0.0
    %316 = vmatpush1.msra.mxu0 %v268
    %317 = vmatprep.subr.mxu0 0.0
    %318 = vmatpush1.msra.mxu0 %v267
    %319 = vmatprep.subr.mxu0 0.0
    %320 = vmatpush1.msra.mxu0 %v266
    %321 = vmatprep.subr.mxu0 0.0
    %322 = vmatpush2.msra.mxu0 0.0
    %323 = vmatprep.subr.mxu0 0.0
    %324 = vmatpush2.msra.mxu0 0.0
    %325 = vmatprep.subr.mxu0 0.0
    %326 = vmatpush2.msra.mxu0 0.0
    %327 = vmatprep.subr.mxu0 0.0
    %328 = vmatpush2.msra.mxu0 0.0
    %329 = vmatprep.subr.mxu0 0.0
    %330 = vmatpush2.msra.mxu0 0.0
    %331 = vmatprep.subr.mxu0 0.0
    %332 = vmatpush2.msra.mxu0 0.0
    %333 = vmatprep.subr.mxu0 0.0
    %334 = vmatpush2.msra.mxu0 0.0
    %335 = vmatprep.subr.mxu0 0.0
    %336 = vmatpush2.msra.mxu0 0.0
    %337 = vmatprep.subr.mxu0 0.0
    %338 = vmatpush2.msra.mxu0 0.0
    %339 = vmatprep.subr.mxu0 0.0
    %340 = vmatpush2.msra.mxu0 0.0
    %341 = vmatprep.subr.mxu0 0.0
    %342 = vmatpush2.msra.mxu0 0.0
    %343 = vmatprep.subr.mxu0 0.0
    %344 = vmatpush2.msra.mxu0 0.0
    %345 = vmatprep.subr.mxu0 0.0
    %346 = vmatpush2.msra.mxu0 0.0
    %347 = vmatprep.subr.mxu0 0.0
    %348 = vmatpush2.msra.mxu0 0.0
    %349 = vmatprep.subr.mxu0 0.0
    %350 = vmatpush2.msra.mxu0 0.0
    %351 = vmatprep.subr.mxu0 0.0
    %352 = vmatpush2.msra.mxu0 0.0
    %353 = vmatprep.mubr.f32.mxu0 0.0
    %354 = vmatmul.mubr.f32.gmra.mxu0 %v265
    %v355 = vpop.f32.mrf.mxu0
    %v356 = vadd.f32 %v287, %v355
    %v357 = vpop.f32.mrf.mxu0
    %358 = vdwg.mxu0
    %v359 = vmax.f32 %v356, 0.0
    %v360 = vld [vmem:[#allocation7] sm:$0xff]
    %v361 = vld [vmem:[#allocation7 + $0x8] sm:$0xff]
    %v362 = vld [vmem:[#allocation7 + $0x10] sm:$0xff]
    %v363 = vld [vmem:[#allocation7 + $0x18] sm:$0xff]
    %v364 = vld [vmem:[#allocation7 + $0x20] sm:$0xff]
    %v365 = vld [vmem:[#allocation7 + $0x28] sm:$0xff]
    %v366 = vld [vmem:[#allocation7 + $0x30] sm:$0xff]
    %v367 = vld [vmem:[#allocation7 + $0x38] sm:$0xff]
    %v368 = vld [vmem:[#allocation7 + $0x40] sm:$0xff]
    %v369 = vld [vmem:[#allocation7 + $0x48] sm:$0xff]
    %v370 = vld [vmem:[#allocation7 + $0x50] sm:$0xff]
    %v371 = vld [vmem:[#allocation7 + $0x58] sm:$0xff]
    %v372 = vld [vmem:[#allocation7 + $0x60] sm:$0xff]
    %v373 = vld [vmem:[#allocation7 + $0x68] sm:$0xff]
    %v374 = vld [vmem:[#allocation7 + $0x70] sm:$0xff]
    %v375 = vld [vmem:[#allocation7 + $0x78] sm:$0xff]
    %v376 = vld [vmem:[%s8] sm:$0x1]
    %v378 = vlaneseq
    %v379 = vshrl.u32 %v378, 7
    %v380 = vsub.s32 0, %v379
    %v381 = vrot.slane %v376, %v380
    %383 = vmatprep.subr.mxu0 0.0
    %384 = vmatpush1.msra.mxu0 %v375
    %385 = vmatprep.subr.mxu0 0.0
    %386 = vmatpush1.msra.mxu0 %v374
    %387 = vmatprep.subr.mxu0 0.0
    %388 = vmatpush1.msra.mxu0 %v373
    %389 = vmatprep.subr.mxu0 0.0
    %390 = vmatpush1.msra.mxu0 %v372
    %391 = vmatprep.subr.mxu0 0.0
    %392 = vmatpush1.msra.mxu0 %v371
    %393 = vmatprep.subr.mxu0 0.0
    %394 = vmatpush1.msra.mxu0 %v370
    %395 = vmatprep.subr.mxu0 0.0
    %396 = vmatpush1.msra.mxu0 %v369
    %397 = vmatprep.subr.mxu0 0.0
    %398 = vmatpush1.msra.mxu0 %v368
    %399 = vmatprep.subr.mxu0 0.0
    %400 = vmatpush1.msra.mxu0 %v367
    %401 = vmatprep.subr.mxu0 0.0
    %402 = vmatpush1.msra.mxu0 %v366
    %403 = vmatprep.subr.mxu0 0.0
    %404 = vmatpush1.msra.mxu0 %v365
    %405 = vmatprep.subr.mxu0 0.0
    %406 = vmatpush1.msra.mxu0 %v364
    %407 = vmatprep.subr.mxu0 0.0
    %408 = vmatpush1.msra.mxu0 %v363
    %409 = vmatprep.subr.mxu0 0.0
    %410 = vmatpush1.msra.mxu0 %v362
    %411 = vmatprep.subr.mxu0 0.0
    %412 = vmatpush1.msra.mxu0 %v361
    %413 = vmatprep.subr.mxu0 0.0
    %414 = vmatpush1.msra.mxu0 %v360
    %415 = vmatprep.subr.mxu0 0.0
    %416 = vmatpush2.msra.mxu0 0.0
    %417 = vmatprep.subr.mxu0 0.0
    %418 = vmatpush2.msra.mxu0 0.0
    %419 = vmatprep.subr.mxu0 0.0
    %420 = vmatpush2.msra.mxu0 0.0
    %421 = vmatprep.subr.mxu0 0.0
    %422 = vmatpush2.msra.mxu0 0.0
    %423 = vmatprep.subr.mxu0 0.0
    %424 = vmatpush2.msra.mxu0 0.0
    %425 = vmatprep.subr.mxu0 0.0
    %426 = vmatpush2.msra.mxu0 0.0
    %427 = vmatprep.subr.mxu0 0.0
    %428 = vmatpush2.msra.mxu0 0.0
    %429 = vmatprep.subr.mxu0 0.0
    %430 = vmatpush2.msra.mxu0 0.0
    %431 = vmatprep.subr.mxu0 0.0
    %432 = vmatpush2.msra.mxu0 0.0
    %433 = vmatprep.subr.mxu0 0.0
    %434 = vmatpush2.msra.mxu0 0.0
    %435 = vmatprep.subr.mxu0 0.0
    %436 = vmatpush2.msra.mxu0 0.0
    %437 = vmatprep.subr.mxu0 0.0
    %438 = vmatpush2.msra.mxu0 0.0
    %439 = vmatprep.subr.mxu0 0.0
    %440 = vmatpush2.msra.mxu0 0.0
    %441 = vmatprep.subr.mxu0 0.0
    %442 = vmatpush2.msra.mxu0 0.0
    %443 = vmatprep.subr.mxu0 0.0
    %444 = vmatpush2.msra.mxu0 0.0
    %445 = vmatprep.subr.mxu0 0.0
    %446 = vmatpush2.msra.mxu0 0.0
    %447 = vmatprep.mubr.f32.mxu0 0.0
    %448 = vmatmul.mubr.f32.gmra.mxu0 %v359
    %v449 = vpop.f32.mrf.mxu0
    %v450 = vadd.f32 %v381, %v449
    %v451 = vpop.f32.mrf.mxu0
    %452 = vdwg.mxu0
    %453 = vst [vmem:[%s9] sm:$0xff] %v450
    // Predicated region
    $region54: #{mlp_forward.1} parent=1 // pred_check
      _
    $region55: #{mlp_forward.1} parent=1 // pred_check_branch
      %455 = sbr.rel (0) target = $region57
    $region56: #{mlp_forward.1} parent=1 // pred_region
      _
    $region57: #{mlp_forward.1} parent=1 // pred_fallthru
      _
    // Predicated region
    $region58: #{mlp_forward.1} parent=1 // pred_check
      _
    $region59: #{mlp_forward.1} parent=1 // pred_check_branch
      %457 = sbr.rel (0) target = $region61
    $region60: #{mlp_forward.1} parent=1 // pred_region
      _
    $region61: #{mlp_forward.1} parent=1 // pred_fallthru
      _
    %458 = vsyncpa [#allocation3], 1
    %459 = vsyncpa [#allocation5], 1
    %460 = vsyncpa [#allocation8], 1

</llo_original>
